<compile_context>
chip_gen: v7x
topology: tpu7x:2x2x1
jax: 0.10.0
libtpu: 0.0.40
codegen_flags: <defaults>
</compile_context>

<pallas_src>
import functools

import jax
import jax.numpy as jnp
from jax.experimental import pallas as pl
from jax.experimental.pallas import tpu as pltpu


_MASK_VALUE = -1e30  # finite sentinel (additive mask): no NaN on all-padding rows


def _round_up(x, m):
    return ((x + m - 1) // m) * m


def _choose_lp_tile(lp):
    """Passage tile: multiple of 16 (bf16 sublane packing).  One tile for
    Lp <= 512; otherwise the tile in {512, 384, 256} with least Lp padding."""
    if lp <= 512:
        return _round_up(lp, 16)
    best_t, best_waste = 512, _round_up(lp, 512) - lp
    for t in (384, 256):
        waste = _round_up(lp, t) - lp
        if waste < best_waste:
            best_t, best_waste = t, waste
    return best_t


def _make_kernel(has_scale, cache_wq):
    """`has_scale` (training) and `cache_wq` (B > 1) are trace-time static."""

    def kernel(*refs):
        i = 0
        scale_ref = None
        if has_scale:
            scale_ref = refs[i]
            i += 1
        p_ref, q_ref, qmadd_ref, w_ref, b_ref, o_ref = refs[i:i + 6]
        scratch = refs[i + 6:]

        bias = b_ref[...]                                  # (1, H) f32

        def fold_w():
            w = w_ref[...]                                 # (D, H) bf16
            if has_scale:
                # (x * s) @ W == x @ (s[:, None] * W)
                w = (w.astype(jnp.float32) * scale_ref[0]).astype(jnp.bfloat16)
            return w

        def make_wqT(w):
            wq = jnp.dot(q_ref[0], w, preferred_element_type=jnp.float32) + bias
            # Transpose once (f32 XLU) and store bf16: canonical MXU feed later.
            return jnp.maximum(wq, 0.0).T.astype(jnp.bfloat16)    # (H, Lq)

        if cache_wq:
            if has_scale:
                w_sc_ref, wqT_ref = scratch[0], scratch[1]
            else:
                w_sc_ref, wqT_ref = None, scratch[0]

            @pl.when(pl.program_id(1) == 0)
            def _():
                w0 = fold_w()
                if has_scale:
                    w_sc_ref[...] = w0
                wqT_ref[...] = make_wqT(w0)

            w = w_sc_ref[...] if has_scale else w_ref[...]
            wqT = wqT_ref[...]
        else:
            # B == 1 path: Lp axis is parallel, recompute Wq per tile.
            w = fold_w()
            wqT = make_wqT(w)

        wp = jnp.dot(p_ref[0], w, preferred_element_type=jnp.float32) + bias
        wp = jnp.maximum(wp, 0.0).astype(jnp.bfloat16)            # (tLp, H)

        # scores = Wp @ Wq^T via a plain (M,K)@(K,N) dot on the cached bf16 Wq^T.
        scores = jnp.dot(wp, wqT, preferred_element_type=jnp.float32)  # (tLp, Lq)
        scores = scores + qmadd_ref[0]                                 # additive mask

        # softmax over the question dimension (dim=2 in the torch code)
        m = jnp.max(scores, axis=-1, keepdims=True)
        e = jnp.exp(scores - m)
        denom = jnp.sum(e, axis=-1, keepdims=True)
        alpha = (e * pl.reciprocal(denom, approx=True)).astype(jnp.bfloat16)

        # output = alpha @ question (original, un-dropped question)
        out = jnp.dot(alpha, q_ref[0], preferred_element_type=jnp.float32)
        o_ref[0] = out.astype(o_ref.dtype)

    return kernel


@functools.partial(jax.jit, static_argnames=("out_dtype",))
def word_attention(passage, question, q_mask, W, b, drop_scale=None, out_dtype=None):
    """passage (B,Lp,D), question (B,Lq,D), q_mask (B,Lq) bool (True = padding),
    W (D,H) (transpose of torch nn.Linear weight), b (H,),
    drop_scale None or (B,1,D) variational-dropout scale (mask / keep_prob)."""
    B, Lp, D = passage.shape
    _, Lq, _ = question.shape
    H = W.shape[1]
    if out_dtype is None:
        out_dtype = passage.dtype   # set jnp.bfloat16 to halve the writeback stream
    out_itemsize = jnp.dtype(out_dtype).itemsize

    # Lane-dense padding: D/H/Lq to multiples of 128, Lp to a tile multiple.
    D_pad = _round_up(D, 128)
    H_pad = _round_up(H, 128)
    Lq_pad = _round_up(Lq, 128)
    tLp = _choose_lp_tile(Lp)
    Lp_pad = _round_up(Lp, tLp)
    n_lp = Lp_pad // tLp

    # bf16 MXU feeds (halves HBM traffic of p/q/W); mask & bias stay f32.
    p_b = jnp.pad(passage, ((0, 0), (0, Lp_pad - Lp), (0, D_pad - D))).astype(jnp.bfloat16)
    q_b = jnp.pad(question, ((0, 0), (0, Lq_pad - Lq), (0, D_pad - D))).astype(jnp.bfloat16)
    w_b = jnp.pad(W, ((0, D_pad - D), (0, H_pad - H))).astype(jnp.bfloat16)
    b2 = jnp.pad(b, (0, H_pad - H)).reshape(1, H_pad).astype(jnp.float32)
    qm = jnp.pad(q_mask, ((0, 0), (0, Lq_pad - Lq)), constant_values=True)
    qm_add = (qm.astype(jnp.float32) * _MASK_VALUE)[:, None, :]          # (B,1,Lq_pad)

    has_scale = drop_scale is not None
    cache_wq = B > 1   # B == 1: drop the per-batch cache, parallelize Lp instead

    if cache_wq:
        grid = (B, n_lp)
        dims = ("parallel", "arbitrary")
        im_p = lambda bi, li: (bi, li, 0)
        im_q = lambda bi, li: (bi, 0, 0)
        im_qm = lambda bi, li: (bi, 0, 0)
        im_w = lambda bi, li: (0, 0)
        im_b = lambda bi, li: (0, 0)
        im_s = lambda bi, li: (bi, 0, 0)
    else:
        grid = (n_lp,)
        dims = ("parallel",)
        im_p = lambda li: (0, li, 0)
        im_q = lambda li: (0, 0, 0)
        im_qm = lambda li: (0, 0, 0)
        im_w = lambda li: (0, 0)
        im_b = lambda li: (0, 0)
        im_s = lambda li: (0, 0, 0)

    inputs, in_specs = [], []
    if has_scale:
        scale_col = jnp.swapaxes(
            jnp.pad(drop_scale.astype(jnp.float32),
                    ((0, 0), (0, 0), (0, D_pad - D)), constant_values=1.0),
            1, 2)                                                         # (B, D_pad, 1)
        # TODO(synk): single-buffer the grid-invariant scale/W/bias blocks
        # (pipeline_mode=pl.Buffered(1)) once verified on the target Mosaic —
        # trims the double-buffered invariant copies on v7x's 64 MiB VMEM.
        in_specs.append(pl.BlockSpec((1, D_pad, 1), im_s))
        inputs.append(scale_col)
    in_specs += [
        pl.BlockSpec((1, tLp, D_pad), im_p),      # passage tile
        pl.BlockSpec((1, Lq_pad, D_pad), im_q),   # question (whole, constant index)
        pl.BlockSpec((1, 1, Lq_pad), im_qm),      # additive question pad mask
        pl.BlockSpec((D_pad, H_pad), im_w),       # weight (shared)
        pl.BlockSpec((1, H_pad), im_b),           # bias (shared)
    ]
    inputs += [p_b, q_b, qm_add, w_b, b2]

    scratch_shapes = []
    if cache_wq:
        if has_scale:
            scratch_shapes.append(pltpu.VMEM((D_pad, H_pad), jnp.bfloat16))  # folded W
        scratch_shapes.append(pltpu.VMEM((H_pad, Lq_pad), jnp.bfloat16))     # cached Wq^T

    grid_spec = pltpu.PrefetchScalarGridSpec(
        num_scalar_prefetch=0,
        grid=grid,
        in_specs=in_specs,
        out_specs=pl.BlockSpec((1, tLp, D_pad), im_p),
        scratch_shapes=scratch_shapes,
    )

    # Explicit VMEM budget: double-buffered operands + scratches + f32
    # temporaries, 2x headroom, capped at 48 MiB (v7x: 64 MiB/TC physical).
    need = (2 * tLp * D_pad * 2            # passage tile (bf16)
            + 2 * Lq_pad * D_pad * 2       # question (bf16)
            + 2 * Lq_pad * 4               # additive mask
            + 2 * D_pad * H_pad * 2        # weight (bf16)
            + 2 * H_pad * 4                # bias
            + 2 * tLp * D_pad * out_itemsize)   # output tile
    if has_scale:
        need += 2 * D_pad * 4
    if cache_wq:
        need += H_pad * Lq_pad * 2
        if has_scale:
            need += D_pad * H_pad * 2
    need += 3 * tLp * Lq_pad * 4 + tLp * H_pad * 4 + tLp * D_pad * 4      # temps
    vmem_limit = int(min(max(2 * need, 32 << 20), 48 << 20))
    vmem_limit = max(vmem_limit, need + (8 << 20))

    flops = 2 * B * (Lp_pad * D_pad * H_pad + Lq_pad * D_pad * H_pad
                     + Lp_pad * Lq_pad * H_pad + Lp_pad * Lq_pad * D_pad)
    bytes_accessed = (p_b.size * 2 + q_b.size * 2 + w_b.size * 2 + b2.size * 4
                      + qm_add.size * 4 + B * Lp_pad * D_pad * out_itemsize)
    if has_scale:
        bytes_accessed += B * D_pad * 4

    out = pl.pallas_call(
        _make_kernel(has_scale, cache_wq),
        out_shape=jax.ShapeDtypeStruct((B, Lp_pad, D_pad), out_dtype),
        grid_spec=grid_spec,
        compiler_params=pltpu.CompilerParams(
            dimension_semantics=dims,
            vmem_limit_bytes=vmem_limit),
        cost_estimate=pl.CostEstimate(
            flops=flops,
            transcendentals=B * Lp_pad * Lq_pad,
            bytes_accessed=bytes_accessed),
    )(*inputs)

    return out[:, :Lp, :D]


def word_attention_forward(passage, p_mask, question, q_mask, W, b,
                           dropout, is_training, rng_key=None):
    """Glue matching WordAttention.forward. p_mask is unused (as in torch)."""
    if is_training and dropout > 0.0:
        # Variational dropout: one (B, 1, D) mask shared by passage & question.
        # TODO(synk): torch's RNG stream cannot be reproduced; jax.random is used.
        keep_prob = 1.0 - dropout
        B, _, D = passage.shape
        u = jax.random.uniform(rng_key, (B, 1, D), dtype=jnp.float32)
        drop_scale = jnp.floor(keep_prob + u) / keep_prob
        return word_attention(passage, question, q_mask, W, b, drop_scale=drop_scale)
    return word_attention(passage, question, q_mask, W, b)


def reference_forward(passage, question, q_mask, W, b, drop_scale=None):
    """Pure-JAX reference using the same bf16 matmul feeds as the kernel."""
    pb = passage.astype(jnp.bfloat16)
    qb = question.astype(jnp.bfloat16)
    wb = W.astype(jnp.bfloat16)
    bias = b.reshape(1, 1, -1).astype(jnp.float32)
    if drop_scale is None:
        wp = jnp.einsum("bld,dh->blh", pb, wb, preferred_element_type=jnp.float32)
        wq = jnp.einsum("bld,dh->blh", qb, wb, preferred_element_type=jnp.float32)
    else:
        scale_col = jnp.swapaxes(drop_scale.astype(jnp.float32), 1, 2)        # (B, D, 1)
        wb_s = (wb.astype(jnp.float32) * scale_col).astype(jnp.bfloat16)      # (B, D, H)
        wp = jnp.einsum("bld,bdh->blh", pb, wb_s, preferred_element_type=jnp.float32)
        wq = jnp.einsum("bld,bdh->blh", qb, wb_s, preferred_element_type=jnp.float32)
    wp = jax.nn.relu(wp + bias).astype(jnp.bfloat16)
    wq = jax.nn.relu(wq + bias).astype(jnp.bfloat16)
    scores = jnp.einsum("bph,bqh->bpq", wp, wq, preferred_element_type=jnp.float32)
    scores = jnp.where(q_mask[:, None, :], _MASK_VALUE, scores)
    alpha = jax.nn.softmax(scores, axis=2).astype(jnp.bfloat16)
    return jnp.einsum("bpq,bqd->bpd", alpha, qb, preferred_element_type=jnp.float32)


if __name__ == "__main__":
    key = jax.random.PRNGKey(0)
    k_p, k_q, k_w, k_d, k_p2 = jax.random.split(key, 5)

    B, Lp, Lq = 2, 8, 8
    input_size, hidden_size = 32, 32
    dropout = 0.2

    passage = jax.random.normal(k_p, (B, Lp, input_size), dtype=jnp.float32)
    question = jax.random.normal(k_q, (B, Lq, input_size), dtype=jnp.float32)

    # p_mask / q_mask: True where the position is padding.
    p_mask = jnp.zeros((B, Lp), dtype=bool)
    q_mask = jnp.zeros((B, Lq), dtype=bool).at[:, -2:].set(True)

    # nn.Linear(input_size, hidden_size): xavier_uniform_ weight, bias = 0.1.
    bound = (6.0 / (input_size + hidden_size)) ** 0.5
    W = jax.random.uniform(k_w, (input_size, hidden_size), dtype=jnp.float32,
                           minval=-bound, maxval=bound)
    b = jnp.full((hidden_size,), 0.1, dtype=jnp.float32)

    # --- Inference path (B > 1: cached Wq^T, batch-parallel grid) ---
    out = word_attention_forward(passage, p_mask, question, q_mask, W, b,
                                 dropout=dropout, is_training=False)
    out = jax.block_until_ready(out)
    ref = reference_forward(passage, question, q_mask, W, b)
    assert out.shape == (B, Lp, input_size)
    assert jnp.allclose(out, ref, atol=2e-2, rtol=2e-2), "inference mismatch"

    # --- Training path (dropout scale folded into W once per batch in-kernel) ---
    keep_prob = 1.0 - dropout
    u = jax.random.uniform(k_d, (B, 1, input_size), dtype=jnp.float32)
    drop_scale = jnp.floor(keep_prob + u) / keep_prob                    # (B, 1, D)
    out_tr = word_attention(passage, question, q_mask, W, b, drop_scale=drop_scale)
    out_tr = jax.block_until_ready(out_tr)
    ref_tr = reference_forward(passage, question, q_mask, W, b, drop_scale=drop_scale)
    assert jnp.allclose(out_tr, ref_tr, atol=2e-2, rtol=2e-2), "training mismatch"

    # --- B == 1 specialization (Lp-parallel grid, no Wq cache) ---
    out_b1 = word_attention(passage[:1], question[:1], q_mask[:1], W, b)
    out_b1 = jax.block_until_ready(out_b1)
    assert jnp.allclose(out_b1, ref[:1], atol=2e-2, rtol=2e-2), "B==1 mismatch"

    # --- Multi-tile passage (exercises Wq^T / folded-W reuse across Lp tiles) ---
    Lp_big = 1024
    passage_big = jax.random.normal(k_p2, (B, Lp_big, input_size), dtype=jnp.float32)
    out_big = word_attention(passage_big, question, q_mask, W, b)
    out_big = jax.block_until_ready(out_big)
    ref_big = reference_forward(passage_big, question, q_mask, W, b)
    assert jnp.allclose(out_big, ref_big, atol=2e-2, rtol=2e-2), "multi-tile mismatch"

    print("KERNEL_OK")
</pallas_src>

<mosaic_0001>
module attributes {stable_mosaic.version = 11 : i64} {
  func.func @kernel(%arg0: i32, %arg1: i32, %arg2: memref<1x16x128xbf16, #tpu.memory_space<vmem>>, %arg3: memref<1x128x128xbf16, #tpu.memory_space<vmem>>, %arg4: memref<1x1x128xf32, #tpu.memory_space<vmem>>, %arg5: memref<128x128xbf16, #tpu.memory_space<vmem>>, %arg6: memref<1x128xf32, #tpu.memory_space<vmem>>, %arg7: memref<1x16x128xf32, #tpu.memory_space<vmem>>, %arg8: memref<128x128xbf16, #tpu.memory_space<vmem>>) attributes {dimension_semantics = [#tpu.dimension_semantics<parallel>, #tpu.dimension_semantics<arbitrary>], iteration_bounds = array<i64: 2, 1>, scalar_prefetch = 0 : i64, scratch_operands = 1 : i64, tpu.core_type = #tpu.core_type<tc>, window_params = [{transform_indices = @transform_0, window_bounds = array<i64: 1, 16, 128>}, {transform_indices = @transform_1, window_bounds = array<i64: 1, 128, 128>}, {transform_indices = @transform_2, window_bounds = array<i64: 1, 1, 128>}, {pipeline_mode = #tpu.pipeline_mode<synchronous>, transform_indices = @transform_3, window_bounds = array<i64: 128, 128>}, {pipeline_mode = #tpu.pipeline_mode<synchronous>, transform_indices = @transform_4, window_bounds = array<i64: 1, 128>}, {transform_indices = @transform_5, window_bounds = array<i64: 1, 16, 128>}]} {
    %c0 = arith.constant 0 : index
    %c0_0 = arith.constant 0 : index
    %0 = vector.load %arg6[%c0, %c0_0] : memref<1x128xf32, #tpu.memory_space<vmem>>, vector<1x128xf32>
    %c0_i32 = arith.constant 0 : i32
    %1 = arith.cmpi eq, %arg1, %c0_i32 : i32
    %2 = arith.extui %1 : i1 to i32
    %c0_i32_1 = arith.constant 0 : i32
    %3 = arith.cmpi ne, %2, %c0_i32_1 : i32
    scf.if %3 {
      %c0_23 = arith.constant 0 : index
      %c0_24 = arith.constant 0 : index
      %36 = vector.load %arg5[%c0_23, %c0_24] : memref<128x128xbf16, #tpu.memory_space<vmem>>, vector<128x128xbf16>
      %c0_25 = arith.constant 0 : index
      %c0_26 = arith.constant 0 : index
      %c0_27 = arith.constant 0 : index
      %37 = vector.load %arg3[%c0_25, %c0_26, %c0_27] : memref<1x128x128xbf16, #tpu.memory_space<vmem>>, vector<1x128x128xbf16>
      %38 = vector.shape_cast %37 : vector<1x128x128xbf16> to vector<128x128xbf16>
      %cst_28 = arith.constant dense<0.000000e+00> : vector<128x128xf32>
      %39 = tpu.matmul %38, %36, %cst_28 {dimension_numbers = #tpu.dot_dimension_numbers<[1], [0], [0], [1], [0, 0, 1, 1], [], []>} : vector<128x128xbf16>, vector<128x128xbf16>, vector<128x128xf32> -> vector<128x128xf32>
      %40 = vector.broadcast %0 : vector<1x128xf32> to vector<128x128xf32>
      %41 = arith.addf %39, %40 : vector<128x128xf32>
      %cst_29 = arith.constant 0.000000e+00 : f32
      %42 = vector.broadcast %cst_29 : f32 to vector<128x128xf32>
      %43 = arith.maximumf %41, %42 : vector<128x128xf32>
      %44 = tpu.transpose %43, [1, 0] : vector<128x128xf32> -> vector<128x128xf32>
      %45 = arith.truncf %44 : vector<128x128xf32> to vector<128x128xbf16>
      %c0_30 = arith.constant 0 : index
      %c0_31 = arith.constant 0 : index
      %46 = vector.load %arg8[%c0_30, %c0_31] : memref<128x128xbf16, #tpu.memory_space<vmem>>, vector<128x128xbf16>
      tpu.vector_store %arg8[%c0_30, %c0_31], %45 {strides = array<i32>} : memref<128x128xbf16, #tpu.memory_space<vmem>>, vector<128x128xbf16>,
    } else {
    }
    %c0_2 = arith.constant 0 : index
    %c0_3 = arith.constant 0 : index
    %4 = vector.load %arg5[%c0_2, %c0_3] : memref<128x128xbf16, #tpu.memory_space<vmem>>, vector<128x128xbf16>
    %c0_4 = arith.constant 0 : index
    %c0_5 = arith.constant 0 : index
    %5 = vector.load %arg8[%c0_4, %c0_5] : memref<128x128xbf16, #tpu.memory_space<vmem>>, vector<128x128xbf16>
    %c0_6 = arith.constant 0 : index
    %c0_7 = arith.constant 0 : index
    %c0_8 = arith.constant 0 : index
    %6 = vector.load %arg2[%c0_6, %c0_7, %c0_8] : memref<1x16x128xbf16, #tpu.memory_space<vmem>>, vector<1x16x128xbf16>
    %7 = vector.shape_cast %6 : vector<1x16x128xbf16> to vector<16x128xbf16>
    %cst = arith.constant dense<0.000000e+00> : vector<16x128xf32>
    %8 = tpu.matmul %7, %4, %cst {dimension_numbers = #tpu.dot_dimension_numbers<[1], [0], [0], [1], [0, 0, 1, 1], [], []>} : vector<16x128xbf16>, vector<128x128xbf16>, vector<16x128xf32> -> vector<16x128xf32>
    %9 = vector.broadcast %0 : vector<1x128xf32> to vector<16x128xf32>
    %10 = arith.addf %8, %9 : vector<16x128xf32>
    %cst_9 = arith.constant 0.000000e+00 : f32
    %11 = vector.broadcast %cst_9 : f32 to vector<16x128xf32>
    %12 = arith.maximumf %10, %11 : vector<16x128xf32>
    %13 = arith.truncf %12 : vector<16x128xf32> to vector<16x128xbf16>
    %cst_10 = arith.constant dense<0.000000e+00> : vector<16x128xf32>
    %14 = tpu.matmul %13, %5, %cst_10 {dimension_numbers = #tpu.dot_dimension_numbers<[1], [0], [0], [1], [0, 0, 1, 1], [], []>} : vector<16x128xbf16>, vector<128x128xbf16>, vector<16x128xf32> -> vector<16x128xf32>
    %c0_11 = arith.constant 0 : index
    %c0_12 = arith.constant 0 : index
    %c0_13 = arith.constant 0 : index
    %15 = vector.load %arg4[%c0_11, %c0_12, %c0_13] : memref<1x1x128xf32, #tpu.memory_space<vmem>>, vector<1x1x128xf32>
    %16 = vector.shape_cast %15 : vector<1x1x128xf32> to vector<1x128xf32>
    %17 = vector.broadcast %16 : vector<1x128xf32> to vector<16x128xf32>
    %18 = arith.addf %14, %17 : vector<16x128xf32>
    %cst_14 = arith.constant dense<0xFF800000> : vector<16xf32>
    %19 = vector.multi_reduction <maximumf>, %18, %cst_14 [1] : vector<16x128xf32> to vector<16xf32>
    %20 = vector.shape_cast %19 : vector<16xf32> to vector<16x1xf32>
    %21 = vector.broadcast %20 : vector<16x1xf32> to vector<16x128xf32>
    %22 = arith.subf %18, %21 : vector<16x128xf32>
    %23 = math.exp %22 : vector<16x128xf32>
    %cst_15 = arith.constant dense<0.000000e+00> : vector<16xf32>
    %24 = vector.multi_reduction <add>, %23, %cst_15 [1] : vector<16x128xf32> to vector<16xf32>
    %25 = vector.shape_cast %24 : vector<16xf32> to vector<16x1xf32>
    %26 = tpu.reciprocal %25 {approx = true} : vector<16x1xf32> -> vector<16x1xf32>
    %27 = vector.broadcast %26 : vector<16x1xf32> to vector<16x128xf32>
    %28 = arith.mulf %23, %27 : vector<16x128xf32>
    %29 = arith.truncf %28 : vector<16x128xf32> to vector<16x128xbf16>
    %c0_16 = arith.constant 0 : index
    %c0_17 = arith.constant 0 : index
    %c0_18 = arith.constant 0 : index
    %30 = vector.load %arg3[%c0_16, %c0_17, %c0_18] : memref<1x128x128xbf16, #tpu.memory_space<vmem>>, vector<1x128x128xbf16>
    %31 = vector.shape_cast %30 : vector<1x128x128xbf16> to vector<128x128xbf16>
    %cst_19 = arith.constant dense<0.000000e+00> : vector<16x128xf32>
    %32 = tpu.matmul %29, %31, %cst_19 {dimension_numbers = #tpu.dot_dimension_numbers<[1], [0], [0], [1], [0, 0, 1, 1], [], []>} : vector<16x128xbf16>, vector<128x128xbf16>, vector<16x128xf32> -> vector<16x128xf32>
    %c0_20 = arith.constant 0 : index
    %c0_21 = arith.constant 0 : index
    %c0_22 = arith.constant 0 : index
    %33 = vector.load %arg7[%c0_20, %c0_21, %c0_22] : memref<1x16x128xf32, #tpu.memory_space<vmem>>, vector<1x16x128xf32>
    %34 = vector.shape_cast %33 : vector<1x16x128xf32> to vector<16x128xf32>
    %35 = vector.shape_cast %32 : vector<16x128xf32> to vector<1x16x128xf32>
    tpu.vector_store %arg7[%c0_20, %c0_21, %c0_22], %35 {strides = array<i32>} : memref<1x16x128xf32, #tpu.memory_space<vmem>>, vector<1x16x128xf32>,
    return
  }
  func.func @transform_0(%arg0: i32, %arg1: i32) -> (i32, i32, i32) {
    %c0_i32 = arith.constant 0 : i32
    %c0_i32_0 = arith.constant 0 : i32
    return %arg0, %arg1, %c0_i32 : i32, i32, i32
  }
  func.func @transform_1(%arg0: i32, %arg1: i32) -> (i32, i32, i32) {
    %c0_i32 = arith.constant 0 : i32
    %c0_i32_0 = arith.constant 0 : i32
    %c0_i32_1 = arith.constant 0 : i32
    return %arg0, %c0_i32, %c0_i32_0 : i32, i32, i32
  }
  func.func @transform_2(%arg0: i32, %arg1: i32) -> (i32, i32, i32) {
    %c0_i32 = arith.constant 0 : i32
    %c0_i32_0 = arith.constant 0 : i32
    %c0_i32_1 = arith.constant 0 : i32
    return %arg0, %c0_i32, %c0_i32_0 : i32, i32, i32
  }
  func.func @transform_3(%arg0: i32, %arg1: i32) -> (i32, i32) {
    %c0_i32 = arith.constant 0 : i32
    %c0_i32_0 = arith.constant 0 : i32
    %c0_i32_1 = arith.constant 0 : i32
    return %c0_i32, %c0_i32_0 : i32, i32
  }
  func.func @transform_4(%arg0: i32, %arg1: i32) -> (i32, i32) {
    %c0_i32 = arith.constant 0 : i32
    %c0_i32_0 = arith.constant 0 : i32
    %c0_i32_1 = arith.constant 0 : i32
    return %c0_i32, %c0_i32_0 : i32, i32
  }
  func.func @transform_5(%arg0: i32, %arg1: i32) -> (i32, i32, i32) {
    %c0_i32 = arith.constant 0 : i32
    %c0_i32_0 = arith.constant 0 : i32
    return %arg0, %arg1, %c0_i32 : i32, i32, i32
  }
}

</mosaic_0001>

<llo_original>
// kernel: word_attention.1
$region0: #{word_attention.1}
  #allocation0 [shape = 'u32[]', space=smem, size = 0x4, offset = 0x4, fixed_abs, tag = 'smem constant byte address 0x4 - core index']
  #allocation1 [shape = 'u32[144,128]{1,0:T(1,128)}', space=vmem, size = 0x12000, scoped, tag = 'internal scratch']
  #allocation2 [shape = 'bf16[128,128]{1,0:T(16,128)(2,1)}', space=vmem, size = 0x8000, scoped, tag = 'scratch operand']
  %s0 = inlined_call_operand.vmem [shape: bf16[2,16,128], index: 0, kind: input, shape index: {}]
  %s1 = inlined_call_operand.vmem [shape: bf16[2,128,128], index: 1, kind: input, shape index: {}]
  %s2 = inlined_call_operand.vmem [shape: f32[2,1,128], index: 2, kind: input, shape index: {}]
  %s3 = inlined_call_operand.vmem [shape: bf16[128,128], index: 3, kind: input, shape index: {}]
  %s4 = inlined_call_operand.vmem [shape: f32[1,128], index: 4, kind: input, shape index: {}]
  %s5 = inlined_call_operand.vmem [shape: f32[2,16,128], index: 5, kind: output, shape index: {}]
  %s6 = sld [smem:[#allocation0]]
  $region57: #{word_attention.1} parent=0
    _
  %s8 = ssub.s32 1, %s6
  %s9 = scalar_select 0, %s8, %s6
  loop: start=0, step=1, limit=4
  $region2: #{word_attention.1} parent=0 // loop_pre_header
    _
  $region3: #{word_attention.1} parent=0 // loop_header
    %s11 = sphi 0, %s15
    %p12 = scmp.ge.s32.totalorder %s11, 4
    %s18 = sphi 0, %s30
    %s19 = sphi 0, %s26
    %s20 = sphi 0, %s18
    %s21 = sphi 0, %s19
    %s22 = sphi 0, %s20
    %s23 = sphi 0, %s21
    %s35 = sphi 0, %s37
    %s38 = sphi 0, %s35
    %s39 = sphi 0, %s38
    %s55 = sphi 0, %s39
    %s61 = sphi 0, %s63
    %s64 = sphi 0, %s61
    %s65 = sphi 0, %s64
    %s81 = sphi 0, %s65
    %s87 = sphi 0, %s89
    %s90 = sphi 0, %s87
    %s91 = sphi 0, %s90
    %s107 = sphi 0, %s91
    %s111 = sphi 0, %s111
    %s113 = sphi 0, %s111
    %s114 = sphi 0, %s113
    %s128 = sphi 0, %s114
    %s132 = sphi 0, %s132
    %s134 = sphi 0, %s132
    %s135 = sphi 0, %s134
    %s149 = sphi 0, %s135
    %s157 = sphi 0, %s159
    %s160 = sphi 0, %s157
    %s161 = sphi 0, %s160
    %s177 = sphi 0, %s161
  $region4: #{word_attention.1} parent=0 // loop_header_branch
    %14 = sbr.rel (%p12) target = $region8
  $region5: #{word_attention.1} parent=0 // loop_body
    %s16 = ssub.s32 %s11, 1
    %s17 = ssub.s32 %s11, 2
    %s24 = sadd.s32 1, %s19
    %p25 = scmp.ge.s32.totalorder %s24, 1
    %s26 = scalar_select %p25, 0, %s24
    %s27 = sadd.s32 1, %s18
    %s28 = scalar_select %p25, %s27, %s18
    %p29 = scmp.ge.s32.totalorder %s28, 2
    %s30 = scalar_select %p29, 0, %s28
    %s31 = ssub.s32 %s18, %s30
    %s32 = ssub.s32 %s19, %s26
    %s33 = sor.u32 %s31, %s32
    %p34 = scmp.eq.s32.totalorder %s33, 0
    %s36 = sadd.s32 %s35, 1
    %s37 = scalar_select %p34, %s35, %s36
    %p40 = pneg %p34
    %p41 = scmp.eq.s32.totalorder %s11, 1
    %p42 = por %p40, %p41
    %p43 = scmp.ne.s32.totalorder %s35, %s38
    %p44 = scmp.eq.s32.totalorder %s11, 0
    %p45 = por %p43, %p44
    %p46 = scmp.ne.s32.totalorder %s35, %s38
    %p47 = scmp.eq.s32.totalorder %s16, 1
    %p48 = por %p46, %p47
    %p49 = scmp.ne.s32.totalorder %s38, %s39
    %p50 = scmp.eq.s32.totalorder %s16, 0
    %p51 = por %p49, %p50
    %p52 = scmp.ne.s32.totalorder %s38, %s39
    %p53 = scmp.eq.s32.totalorder %s17, 1
    %p54 = por %p52, %p53
    %p56 = scmp.ne.s32.totalorder %s39, %s55
    %p57 = scmp.eq.s32.totalorder %s17, 0
    %p58 = por %p56, %p57
    %s59 = ssub.s32 %s18, %s30
    %p60 = scmp.eq.s32.totalorder %s59, 0
    %s62 = sadd.s32 %s61, 1
    %s63 = scalar_select %p60, %s61, %s62
    %p66 = pneg %p60
    %p67 = scmp.eq.s32.totalorder %s11, 1
    %p68 = por %p66, %p67
    %p69 = scmp.ne.s32.totalorder %s61, %s64
    %p70 = scmp.eq.s32.totalorder %s11, 0
    %p71 = por %p69, %p70
    %p72 = scmp.ne.s32.totalorder %s61, %s64
    %p73 = scmp.eq.s32.totalorder %s16, 1
    %p74 = por %p72, %p73
    %p75 = scmp.ne.s32.totalorder %s64, %s65
    %p76 = scmp.eq.s32.totalorder %s16, 0
    %p77 = por %p75, %p76
    %p78 = scmp.ne.s32.totalorder %s64, %s65
    %p79 = scmp.eq.s32.totalorder %s17, 1
    %p80 = por %p78, %p79
    %p82 = scmp.ne.s32.totalorder %s65, %s81
    %p83 = scmp.eq.s32.totalorder %s17, 0
    %p84 = por %p82, %p83
    %s85 = ssub.s32 %s18, %s30
    %p86 = scmp.eq.s32.totalorder %s85, 0
    %s88 = sadd.s32 %s87, 1
    %s89 = scalar_select %p86, %s87, %s88
    %p92 = pneg %p86
    %p93 = scmp.eq.s32.totalorder %s11, 1
    %p94 = por %p92, %p93
    %p95 = scmp.ne.s32.totalorder %s87, %s90
    %p96 = scmp.eq.s32.totalorder %s11, 0
    %p97 = por %p95, %p96
    %p98 = scmp.ne.s32.totalorder %s87, %s90
    %p99 = scmp.eq.s32.totalorder %s16, 1
    %p100 = por %p98, %p99
    %p101 = scmp.ne.s32.totalorder %s90, %s91
    %p102 = scmp.eq.s32.totalorder %s16, 0
    %p103 = por %p101, %p102
    %p104 = scmp.ne.s32.totalorder %s90, %s91
    %p105 = scmp.eq.s32.totalorder %s17, 1
    %p106 = por %p104, %p105
    %p108 = scmp.ne.s32.totalorder %s91, %s107
    %p109 = scmp.eq.s32.totalorder %s17, 0
    %p110 = por %p108, %p109
    %s112 = sadd.s32 %s111, 1
    %p115 = scmp.eq.s32.totalorder %s11, 1
    %p116 = scmp.ne.s32.totalorder %s111, %s113
    %p117 = scmp.eq.s32.totalorder %s11, 0
    %p118 = por %p116, %p117
    %p119 = scmp.ne.s32.totalorder %s111, %s113
    %p120 = scmp.eq.s32.totalorder %s16, 1
    %p121 = por %p119, %p120
    %p122 = scmp.ne.s32.totalorder %s113, %s114
    %p123 = scmp.eq.s32.totalorder %s16, 0
    %p124 = por %p122, %p123
    %p125 = scmp.ne.s32.totalorder %s113, %s114
    %p126 = scmp.eq.s32.totalorder %s17, 1
    %p127 = por %p125, %p126
    %p129 = scmp.ne.s32.totalorder %s114, %s128
    %p130 = scmp.eq.s32.totalorder %s17, 0
    %p131 = por %p129, %p130
    %s133 = sadd.s32 %s132, 1
    %p136 = scmp.eq.s32.totalorder %s11, 1
    %p137 = scmp.ne.s32.totalorder %s132, %s134
    %p138 = scmp.eq.s32.totalorder %s11, 0
    %p139 = por %p137, %p138
    %p140 = scmp.ne.s32.totalorder %s132, %s134
    %p141 = scmp.eq.s32.totalorder %s16, 1
    %p142 = por %p140, %p141
    %p143 = scmp.ne.s32.totalorder %s134, %s135
    %p144 = scmp.eq.s32.totalorder %s16, 0
    %p145 = por %p143, %p144
    %p146 = scmp.ne.s32.totalorder %s134, %s135
    %p147 = scmp.eq.s32.totalorder %s17, 1
    %p148 = por %p146, %p147
    %p150 = scmp.ne.s32.totalorder %s135, %s149
    %p151 = scmp.eq.s32.totalorder %s17, 0
    %p152 = por %p150, %p151
    %s153 = ssub.s32 %s18, %s30
    %s154 = ssub.s32 %s19, %s26
    %s155 = sor.u32 %s153, %s154
    %p156 = scmp.eq.s32.totalorder %s155, 0
    %s158 = sadd.s32 %s157, 1
    %s159 = scalar_select %p156, %s157, %s158
    %p162 = pneg %p156
    %p163 = scmp.eq.s32.totalorder %s11, 1
    %p164 = por %p162, %p163
    %p165 = scmp.ne.s32.totalorder %s157, %s160
    %p166 = scmp.eq.s32.totalorder %s11, 0
    %p167 = por %p165, %p166
    %p168 = scmp.ne.s32.totalorder %s157, %s160
    %p169 = scmp.eq.s32.totalorder %s16, 1
    %p170 = por %p168, %p169
    %p171 = scmp.ne.s32.totalorder %s160, %s161
    %p172 = scmp.eq.s32.totalorder %s16, 0
    %p173 = por %p171, %p172
    %p174 = scmp.ne.s32.totalorder %s160, %s161
    %p175 = scmp.eq.s32.totalorder %s17, 1
    %p176 = por %p174, %p175
    %p178 = scmp.ne.s32.totalorder %s161, %s177
    %p179 = scmp.eq.s32.totalorder %s17, 0
    %p180 = por %p178, %p179
    %p181 = scmp.le.s32.totalorder 1, %s11
    %p182 = scmp.lt.s32.totalorder %s11, 3
    %p183 = pnand %p181, %p182
    %p184 = pneg %p183
    // Predicated region
    $region9: #{word_attention.1} parent=5 // pred_check
      _
    $region10: #{word_attention.1} parent=5 // pred_check_branch
      %186 = sbr.rel (%p183) target = $region12
    $region11: #{word_attention.1} parent=5 // pred_region
      %s187 = ssub.s32 %s11, 1
      // Predicated region
      $region13: #{word_attention.1} parent=11 // pred_check
        %p188 = pneg %p124
      $region14: #{word_attention.1} parent=11 // pred_check_branch
        %190 = sbr.rel (%p188) target = $region16
      $region15: #{word_attention.1} parent=11 // pred_region
        _
      $region16: #{word_attention.1} parent=11 // pred_fallthru
        _
      // Predicated region
      $region17: #{word_attention.1} parent=11 // pred_check
        %p191 = pneg %p145
      $region18: #{word_attention.1} parent=11 // pred_check_branch
        %193 = sbr.rel (%p191) target = $region20
      $region19: #{word_attention.1} parent=11 // pred_region
        _
      $region20: #{word_attention.1} parent=11 // pred_fallthru
        _
    $region12: #{word_attention.1} parent=5 // pred_fallthru
      _
    %p194 = scmp.lt.s32.totalorder %s11, 2
    // Predicated region
    $region21: #{word_attention.1} parent=5 // pred_check
      %p195 = pneg %p194
    $region22: #{word_attention.1} parent=5 // pred_check_branch
      %197 = sbr.rel (%p195) target = $region24
    $region23: #{word_attention.1} parent=5 // pred_region
      // Predicated region
      $region25: #{word_attention.1} parent=23 // pred_check
        %p198 = pneg %p45
      $region26: #{word_attention.1} parent=23 // pred_check_branch
        %200 = sbr.rel (%p198) target = $region28
      $region27: #{word_attention.1} parent=23 // pred_region
        %s201 = smul.u32 2, %s19
        %p202 = scmp.lt.s32.totalorder %s18, 1
        %s203 = scalar_select %p202, %s18, 1
        %p204 = scmp.lt.s32.totalorder %s201, 1
        %s205 = scalar_select %p204, %s201, 1
        %s206 = smul.addr %s203, 2
        %s207 = sadd.s32 %s205, %s206
        %s208 = smul.addr %s207, 4
        %s209 = scalar_lea.vmem %s0, %s208
        %s210 = smul.u32 2, %s19
      $region28: #{word_attention.1} parent=23 // pred_fallthru
        _
      // Predicated region
      $region29: #{word_attention.1} parent=23 // pred_check
        %p211 = pneg %p71
      $region30: #{word_attention.1} parent=23 // pred_check_branch
        %213 = sbr.rel (%p211) target = $region32
      $region31: #{word_attention.1} parent=23 // pred_region
        %p214 = scmp.lt.s32.totalorder %s18, 1
        %s215 = scalar_select %p214, %s18, 1
        %s216 = smul.addr %s215, 16
        %s217 = smul.addr %s216, 4
        %s218 = scalar_lea.vmem %s1, %s217
      $region32: #{word_attention.1} parent=23 // pred_fallthru
        _
      // Predicated region
      $region33: #{word_attention.1} parent=23 // pred_check
        %p219 = pneg %p97
      $region34: #{word_attention.1} parent=23 // pred_check_branch
        %221 = sbr.rel (%p219) target = $region36
      $region35: #{word_attention.1} parent=23 // pred_region
        %p222 = scmp.lt.s32.totalorder %s18, 1
        %s223 = scalar_select %p222, %s18, 1
        %s224 = scalar_lea.vmem %s2, %s223
      $region36: #{word_attention.1} parent=23 // pred_fallthru
        _
    $region24: #{word_attention.1} parent=5 // pred_fallthru
      _
    %p225 = scmp.le.s32.totalorder 1, %s11
    %p226 = scmp.lt.s32.totalorder %s11, 3
    %p227 = pnand %p225, %p226
    %p228 = pneg %p227
    // Predicated region
    $region37: #{word_attention.1} parent=5 // pred_check
      _
    $region38: #{word_attention.1} parent=5 // pred_check_branch
      %230 = sbr.rel (%p227) target = $region40
    $region39: #{word_attention.1} parent=5 // pred_region
      %s231 = ssub.s32 %s11, 1
      %s232 = smul.u32 2, %s21
      %p233 = scmp.lt.s32.totalorder %s20, 1
      %s234 = scalar_select %p233, %s20, 1
      %p235 = scmp.lt.s32.totalorder %s232, 1
      %s236 = scalar_select %p235, %s232, 1
      %s237 = smul.addr %s234, 2
      %s238 = sadd.s32 %s236, %s237
      %s239 = smul.addr %s238, 4
      %s240 = scalar_lea.vmem %s0, %s239
      %p241 = pneg %p51
      %p242 = pneg %p48
      %p243 = scmp.lt.s32.totalorder %s20, 1
      %s244 = scalar_select %p243, %s20, 1
      %s245 = smul.addr %s244, 16
      %s246 = smul.addr %s245, 4
      %s247 = scalar_lea.vmem %s1, %s246
      %p248 = pneg %p77
      %p249 = pneg %p74
      %p250 = scmp.lt.s32.totalorder %s20, 1
      %s251 = scalar_select %p250, %s20, 1
      %s252 = scalar_lea.vmem %s2, %s251
      %p253 = pneg %p103
      %p254 = pneg %p100
      %p255 = pneg %p124
      %p256 = pneg %p121
      %p257 = pneg %p145
      %p258 = pneg %p142
      %p259 = pneg %p173
      %p260 = pneg %p170
      %s261 = smul.u32 2, %s21
      %p262 = scmp.lt.s32.totalorder %s20, 1
      %s263 = scalar_select %p262, %s20, 1
      %p264 = scmp.lt.s32.totalorder %s261, 1
      %s265 = scalar_select %p264, %s261, 1
      %s266 = smul.addr %s263, 2
      %s267 = sadd.s32 %s265, %s266
      %s268 = smul.addr %s267, 8
      %s269 = scalar_lea.vmem %s5, %s268
      %s270 = smul.u32 2, %s21
      %p271 = scmp.lt.s32.totalorder %s20, 1
      %s272 = scalar_select %p271, %s20, 1
      %p273 = scmp.lt.s32.totalorder %s270, 1
      %s274 = scalar_select %p273, %s270, 1
      %s275 = smul.addr %s272, 2
      %s276 = sadd.s32 %s274, %s275
      %s277 = smul.addr %s276, 4
      %s278 = scalar_lea.vmem %s0, %s277
      %s279 = smul.u32 2, %s21
      %p280 = scmp.lt.s32.totalorder %s20, 1
      %s281 = scalar_select %p280, %s20, 1
      %s282 = smul.addr %s281, 16
      %s283 = smul.addr %s282, 4
      %s284 = scalar_lea.vmem %s1, %s283
      %p285 = scmp.lt.s32.totalorder %s20, 1
      %s286 = scalar_select %p285, %s20, 1
      %s287 = scalar_lea.vmem %s2, %s286
      %s288 = smul.u32 2, %s21
      %p289 = scmp.lt.s32.totalorder %s20, 1
      %s290 = scalar_select %p289, %s20, 1
      %p291 = scmp.lt.s32.totalorder %s288, 1
      %s292 = scalar_select %p291, %s288, 1
      %s293 = smul.addr %s290, 2
      %s294 = sadd.s32 %s292, %s293
      %s295 = smul.addr %s294, 8
      %s296 = scalar_lea.vmem %s5, %s295
      %s297 = smul.u32 2, %s21
      %v299 = vld [vmem:[%s4] sm:$0x1]
      %p300 = scmp.eq.s32.totalorder %s21, 0
      // Predicated region
      $region41: #{word_attention.1} parent=39 // pred_check
        %p301 = pneg %p300
      $region42: #{word_attention.1} parent=39 // pred_check_branch
        %303 = sbr.rel (%p301) target = $region44
      $region43: #{word_attention.1} parent=39 // pred_region
        %v304 = vld [vmem:[%s3] sm:$0xf]
        %v305 = vld [vmem:[%s3 + $0x4] sm:$0xf]
        %v306 = vld [vmem:[%s3 + $0x8] sm:$0xf]
        %v307 = vld [vmem:[%s3 + $0xc] sm:$0xf]
        %v308 = vld [vmem:[%s3 + $0x10] sm:$0xf]
        %v309 = vld [vmem:[%s3 + $0x14] sm:$0xf]
        %v310 = vld [vmem:[%s3 + $0x18] sm:$0xf]
        %v311 = vld [vmem:[%s3 + $0x1c] sm:$0xf]
        %v312 = vld [vmem:[%s3 + $0x20] sm:$0xf]
        %v313 = vld [vmem:[%s3 + $0x24] sm:$0xf]
        %v314 = vld [vmem:[%s3 + $0x28] sm:$0xf]
        %v315 = vld [vmem:[%s3 + $0x2c] sm:$0xf]
        %v316 = vld [vmem:[%s3 + $0x30] sm:$0xf]
        %v317 = vld [vmem:[%s3 + $0x34] sm:$0xf]
        %v318 = vld [vmem:[%s3 + $0x38] sm:$0xf]
        %v319 = vld [vmem:[%s3 + $0x3c] sm:$0xf]
        %v320 = vld [vmem:[%s284] sm:$0xf]
        %v321 = vld [vmem:[%s284 + $0x4] sm:$0xf]
        %v322 = vld [vmem:[%s284 + $0x8] sm:$0xf]
        %v323 = vld [vmem:[%s284 + $0xc] sm:$0xf]
        %v324 = vld [vmem:[%s284 + $0x10] sm:$0xf]
        %v325 = vld [vmem:[%s284 + $0x14] sm:$0xf]
        %v326 = vld [vmem:[%s284 + $0x18] sm:$0xf]
        %v327 = vld [vmem:[%s284 + $0x1c] sm:$0xf]
        %v328 = vld [vmem:[%s284 + $0x20] sm:$0xf]
        %v329 = vld [vmem:[%s284 + $0x24] sm:$0xf]
        %v330 = vld [vmem:[%s284 + $0x28] sm:$0xf]
        %v331 = vld [vmem:[%s284 + $0x2c] sm:$0xf]
        %v332 = vld [vmem:[%s284 + $0x30] sm:$0xf]
        %v333 = vld [vmem:[%s284 + $0x34] sm:$0xf]
        %v334 = vld [vmem:[%s284 + $0x38] sm:$0xf]
        %v335 = vld [vmem:[%s284 + $0x3c] sm:$0xf]
        %v337 = vlaneseq
        %v338 = vshrl.u32 %v337, 7
        %v339 = vsub.s32 0, %v338
        %v340 = vrot.slane %v299, %v339
        %v358 = vunpack.c.l.b16 %v320
        %v359 = vunpack.c.l.b16 %v321
        %v360 = vunpack.c.l.b16 %v322
        %v361 = vunpack.c.l.b16 %v323
        %v362 = vunpack.c.l.b16 %v324
        %v363 = vunpack.c.l.b16 %v325
        %v364 = vunpack.c.l.b16 %v326
        %v365 = vunpack.c.l.b16 %v327
        %v366 = vunpack.c.l.b16 %v328
        %v367 = vunpack.c.l.b16 %v329
        %v368 = vunpack.c.l.b16 %v330
        %v369 = vunpack.c.l.b16 %v331
        %v370 = vunpack.c.l.b16 %v332
        %v371 = vunpack.c.l.b16 %v333
        %v372 = vunpack.c.l.b16 %v334
        %v373 = vunpack.c.l.b16 %v335
        %v374 = vpack.c.b16 %v359, %v358
        %v375 = vpack.c.b16 %v361, %v360
        %v376 = vpack.c.b16 %v363, %v362
        %v377 = vpack.c.b16 %v365, %v364
        %v378 = vpack.c.b16 %v367, %v366
        %v379 = vpack.c.b16 %v369, %v368
        %v380 = vpack.c.b16 %v371, %v370
        %v381 = vpack.c.b16 %v373, %v372
        %v406 = vunpack.c.l.b16 %v304
        %v407 = vunpack.c.l.b16 %v305
        %v408 = vunpack.c.l.b16 %v306
        %v409 = vunpack.c.l.b16 %v307
        %v410 = vunpack.c.l.b16 %v308
        %v411 = vunpack.c.l.b16 %v309
        %v412 = vunpack.c.l.b16 %v310
        %v413 = vunpack.c.l.b16 %v311
        %v414 = vunpack.c.l.b16 %v312
        %v415 = vunpack.c.l.b16 %v313
        %v416 = vunpack.c.l.b16 %v314
        %v417 = vunpack.c.l.b16 %v315
        %v418 = vunpack.c.l.b16 %v316
        %v419 = vunpack.c.l.b16 %v317
        %v420 = vunpack.c.l.b16 %v318
        %v421 = vunpack.c.l.b16 %v319
        %v422 = vpack.c.b16 %v407, %v406
        %v423 = vpack.c.b16 %v409, %v408
        %v424 = vpack.c.b16 %v411, %v410
        %v425 = vpack.c.b16 %v413, %v412
        %v426 = vpack.c.b16 %v415, %v414
        %v427 = vpack.c.b16 %v417, %v416
        %v428 = vpack.c.b16 %v419, %v418
        %v429 = vpack.c.b16 %v421, %v420
        %438 = vmatprep.subr.bf16.mxu0 0
        %439 = vmatpush1.bf16.msra.mxu0 %v422
        %440 = vmatprep.subr.bf16.mxu0 0
        %441 = vmatpush1.bf16.msra.mxu0 %v423
        %442 = vmatprep.subr.bf16.mxu0 0
        %443 = vmatpush1.bf16.msra.mxu0 %v424
        %444 = vmatprep.subr.bf16.mxu0 0
        %445 = vmatpush1.bf16.msra.mxu0 %v425
        %446 = vmatprep.subr.bf16.mxu0 0
        %447 = vmatpush1.bf16.msra.mxu0 %v426
        %448 = vmatprep.subr.bf16.mxu0 0
        %449 = vmatpush1.bf16.msra.mxu0 %v427
        %450 = vmatprep.subr.bf16.mxu0 0
        %451 = vmatpush1.bf16.msra.mxu0 %v428
        %452 = vmatprep.subr.bf16.mxu0 0
        %453 = vmatpush1.bf16.msra.mxu0 %v429
        %454 = vmatprep.subr.bf16.mxu0 0
        %455 = vmatpush1.bf16.msra.mxu0 0
        %456 = vmatprep.subr.bf16.mxu0 0
        %457 = vmatpush1.bf16.msra.mxu0 0
        %458 = vmatprep.subr.bf16.mxu0 0
        %459 = vmatpush1.bf16.msra.mxu0 0
        %460 = vmatprep.subr.bf16.mxu0 0
        %461 = vmatpush1.bf16.msra.mxu0 0
        %462 = vmatprep.subr.bf16.mxu0 0
        %463 = vmatpush1.bf16.msra.mxu0 0
        %464 = vmatprep.subr.bf16.mxu0 0
        %465 = vmatpush1.bf16.msra.mxu0 0
        %466 = vmatprep.subr.bf16.mxu0 0
        %467 = vmatpush1.bf16.msra.mxu0 0
        %468 = vmatprep.subr.bf16.mxu0 0
        %469 = vmatpush1.bf16.msra.mxu0 0
        %470 = vmatprep.mubr.bf16.mxu0 0
        %471 = vmatmul.mubr.bf16.gmra.mrb[0].mxu0 %v374
        %v472 = vpop.f32.mrb[0].mxu0
        %v473 = vadd.f32 %v340, %v472
        %v474 = vpop.f32.mrb[0].mxu0
        %v475 = vpop.f32.mrb[0].mxu0
        %v476 = vadd.f32 %v340, %v475
        %v477 = vpop.f32.mrb[0].mxu0
        %478 = vmatprep.mubr.bf16.mxu0 0
        %479 = vmatmul.mubr.bf16.gmra.mrb[0].mxu0 %v375
        %v480 = vpop.f32.mrb[0].mxu0
        %v481 = vadd.f32 %v340, %v480
        %v482 = vpop.f32.mrb[0].mxu0
        %v483 = vpop.f32.mrb[0].mxu0
        %v484 = vadd.f32 %v340, %v483
        %v485 = vpop.f32.mrb[0].mxu0
        %486 = vmatprep.mubr.bf16.mxu0 0
        %487 = vmatmul.mubr.bf16.gmra.mrb[0].mxu0 %v376
        %v488 = vpop.f32.mrb[0].mxu0
        %v489 = vadd.f32 %v340, %v488
        %v490 = vpop.f32.mrb[0].mxu0
        %v491 = vpop.f32.mrb[0].mxu0
        %v492 = vadd.f32 %v340, %v491
        %v493 = vpop.f32.mrb[0].mxu0
        %494 = vmatprep.mubr.bf16.mxu0 0
        %495 = vmatmul.mubr.bf16.gmra.mrb[0].mxu0 %v377
        %v496 = vpop.f32.mrb[0].mxu0
        %v497 = vadd.f32 %v340, %v496
        %v498 = vpop.f32.mrb[0].mxu0
        %v499 = vpop.f32.mrb[0].mxu0
        %v500 = vadd.f32 %v340, %v499
        %v501 = vpop.f32.mrb[0].mxu0
        %502 = vmatprep.mubr.bf16.mxu0 0
        %503 = vmatmul.mubr.bf16.gmra.mrb[0].mxu0 %v378
        %v504 = vpop.f32.mrb[0].mxu0
        %v505 = vadd.f32 %v340, %v504
        %v506 = vpop.f32.mrb[0].mxu0
        %v507 = vpop.f32.mrb[0].mxu0
        %v508 = vadd.f32 %v340, %v507
        %v509 = vpop.f32.mrb[0].mxu0
        %510 = vmatprep.mubr.bf16.mxu0 0
        %511 = vmatmul.mubr.bf16.gmra.mrb[0].mxu0 %v379
        %v512 = vpop.f32.mrb[0].mxu0
        %v513 = vadd.f32 %v340, %v512
        %v514 = vpop.f32.mrb[0].mxu0
        %v515 = vpop.f32.mrb[0].mxu0
        %v516 = vadd.f32 %v340, %v515
        %v517 = vpop.f32.mrb[0].mxu0
        %518 = vmatprep.mubr.bf16.mxu0 0
        %519 = vmatmul.mubr.bf16.gmra.mrb[0].mxu0 %v380
        %v520 = vpop.f32.mrb[0].mxu0
        %v521 = vadd.f32 %v340, %v520
        %v522 = vpop.f32.mrb[0].mxu0
        %v523 = vpop.f32.mrb[0].mxu0
        %v524 = vadd.f32 %v340, %v523
        %v525 = vpop.f32.mrb[0].mxu0
        %526 = vmatprep.mubr.bf16.mxu0 0
        %527 = vmatmul.mubr.bf16.gmra.mrb[0].mxu0 %v381
        %v528 = vpop.f32.mrb[0].mxu0
        %v529 = vadd.f32 %v340, %v528
        %v530 = vpop.f32.mrb[0].mxu0
        %v531 = vpop.f32.mrb[0].mxu0
        %v532 = vadd.f32 %v340, %v531
        %v533 = vpop.f32.mrb[0].mxu0
        %534 = vdwg.mxu0
        %v535 = vmax.f32 %v473, 0.0
        %v536 = vmax.f32 %v476, 0.0
        %v537 = vmax.f32 %v481, 0.0
        %v538 = vmax.f32 %v484, 0.0
        %v539 = vmax.f32 %v489, 0.0
        %v540 = vmax.f32 %v492, 0.0
        %v541 = vmax.f32 %v497, 0.0
        %v542 = vmax.f32 %v500, 0.0
        %v543 = vmax.f32 %v505, 0.0
        %v544 = vmax.f32 %v508, 0.0
        %v545 = vmax.f32 %v513, 0.0
        %v546 = vmax.f32 %v516, 0.0
        %v547 = vmax.f32 %v521, 0.0
        %v548 = vmax.f32 %v524, 0.0
        %v549 = vmax.f32 %v529, 0.0
        %v550 = vmax.f32 %v532, 0.0
        %551 = vxpose.xlu0.b32.start [1/16] %v535, 128
        %552 = vxpose.xlu0.b32.cont [2/16] %v536, 128
        %553 = vxpose.xlu0.b32.cont [3/16] %v537, 128
        %554 = vxpose.xlu0.b32.cont [4/16] %v538, 128
        %555 = vxpose.xlu0.b32.cont [5/16] %v539, 128
        %556 = vxpose.xlu0.b32.cont [6/16] %v540, 128
        %557 = vxpose.xlu0.b32.cont [7/16] %v541, 128
        %558 = vxpose.xlu0.b32.cont [8/16] %v542, 128
        %559 = vxpose.xlu0.b32.cont [9/16] %v543, 128
        %560 = vxpose.xlu0.b32.cont [10/16] %v544, 128
        %561 = vxpose.xlu0.b32.cont [11/16] %v545, 128
        %562 = vxpose.xlu0.b32.cont [12/16] %v546, 128
        %563 = vxpose.xlu0.b32.cont [13/16] %v547, 128
        %564 = vxpose.xlu0.b32.cont [14/16] %v548, 128
        %565 = vxpose.xlu0.b32.cont [15/16] %v549, 128
        %566 = vxpose.xlu0.b32.end [16/16] %v550, 128
        %v567 = vpop.trf.xlu0
        %v568 = vpop.trf.xlu0
        %v569 = vpop.trf.xlu0
        %v570 = vpop.trf.xlu0
        %v571 = vpop.trf.xlu0
        %v572 = vpop.trf.xlu0
        %v573 = vpop.trf.xlu0
        %v574 = vpop.trf.xlu0
        %v575 = vpop.trf.xlu0
        %v576 = vpop.trf.xlu0
        %v577 = vpop.trf.xlu0
        %v578 = vpop.trf.xlu0
        %v579 = vpop.trf.xlu0
        %v580 = vpop.trf.xlu0
        %v581 = vpop.trf.xlu0
        %v582 = vpop.trf.xlu0
        %v583 = vpack.c.bf16 %v568, %v567
        %v584 = vpack.c.bf16 %v570, %v569
        %v585 = vpack.c.bf16 %v572, %v571
        %v586 = vpack.c.bf16 %v574, %v573
        %v587 = vpack.c.bf16 %v576, %v575
        %v588 = vpack.c.bf16 %v578, %v577
        %v589 = vpack.c.bf16 %v580, %v579
        %v590 = vpack.c.bf16 %v582, %v581
        %591 = vst [vmem:[#allocation2] sm:$0xff] %v583
        %592 = vst [vmem:[#allocation2 + $0x8] sm:$0xff] %v584
        %593 = vst [vmem:[#allocation2 + $0x10] sm:$0xff] %v585
        %594 = vst [vmem:[#allocation2 + $0x18] sm:$0xff] %v586
        %595 = vst [vmem:[#allocation2 + $0x20] sm:$0xff] %v587
        %596 = vst [vmem:[#allocation2 + $0x28] sm:$0xff] %v588
        %597 = vst [vmem:[#allocation2 + $0x30] sm:$0xff] %v589
        %598 = vst [vmem:[#allocation2 + $0x38] sm:$0xff] %v590
      $region44: #{word_attention.1} parent=39 // pred_fallthru
        _
      %v599 = vld [vmem:[%s3] sm:$0xf]
      %v600 = vld [vmem:[%s3 + $0x4] sm:$0xf]
      %v601 = vld [vmem:[%s3 + $0x8] sm:$0xf]
      %v602 = vld [vmem:[%s3 + $0xc] sm:$0xf]
      %v603 = vld [vmem:[%s3 + $0x10] sm:$0xf]
      %v604 = vld [vmem:[%s3 + $0x14] sm:$0xf]
      %v605 = vld [vmem:[%s3 + $0x18] sm:$0xf]
      %v606 = vld [vmem:[%s3 + $0x1c] sm:$0xf]
      %v607 = vld [vmem:[%s3 + $0x20] sm:$0xf]
      %v608 = vld [vmem:[%s3 + $0x24] sm:$0xf]
      %v609 = vld [vmem:[%s3 + $0x28] sm:$0xf]
      %v610 = vld [vmem:[%s3 + $0x2c] sm:$0xf]
      %v611 = vld [vmem:[%s3 + $0x30] sm:$0xf]
      %v612 = vld [vmem:[%s3 + $0x34] sm:$0xf]
      %v613 = vld [vmem:[%s3 + $0x38] sm:$0xf]
      %v614 = vld [vmem:[%s3 + $0x3c] sm:$0xf]
      %v615 = vld [vmem:[#allocation2] sm:$0xff]
      %v616 = vld [vmem:[#allocation2 + $0x8] sm:$0xff]
      %v617 = vld [vmem:[#allocation2 + $0x10] sm:$0xff]
      %v618 = vld [vmem:[#allocation2 + $0x18] sm:$0xff]
      %v619 = vld [vmem:[#allocation2 + $0x20] sm:$0xff]
      %v620 = vld [vmem:[#allocation2 + $0x28] sm:$0xff]
      %v621 = vld [vmem:[#allocation2 + $0x30] sm:$0xff]
      %v622 = vld [vmem:[#allocation2 + $0x38] sm:$0xff]
      %v623 = vld [vmem:[%s278] sm:$0xf]
      %v624 = vld [vmem:[%s278 + $0x4] sm:$0xf]
      %v626 = vlaneseq
      %v627 = vshrl.u32 %v626, 7
      %v628 = vsub.s32 0, %v627
      %v629 = vrot.slane %v299, %v628
      %v633 = vunpack.c.l.b16 %v623
      %v634 = vunpack.c.l.b16 %v624
      %v635 = vpack.c.b16 %v634, %v633
      %v653 = vunpack.c.l.b16 %v599
      %v654 = vunpack.c.l.b16 %v600
      %v655 = vunpack.c.l.b16 %v601
      %v656 = vunpack.c.l.b16 %v602
      %v657 = vunpack.c.l.b16 %v603
      %v658 = vunpack.c.l.b16 %v604
      %v659 = vunpack.c.l.b16 %v605
      %v660 = vunpack.c.l.b16 %v606
      %v661 = vunpack.c.l.b16 %v607
      %v662 = vunpack.c.l.b16 %v608
      %v663 = vunpack.c.l.b16 %v609
      %v664 = vunpack.c.l.b16 %v610
      %v665 = vunpack.c.l.b16 %v611
      %v666 = vunpack.c.l.b16 %v612
      %v667 = vunpack.c.l.b16 %v613
      %v668 = vunpack.c.l.b16 %v614
      %v669 = vpack.c.b16 %v654, %v653
      %v670 = vpack.c.b16 %v656, %v655
      %v671 = vpack.c.b16 %v658, %v657
      %v672 = vpack.c.b16 %v660, %v659
      %v673 = vpack.c.b16 %v662, %v661
      %v674 = vpack.c.b16 %v664, %v663
      %v675 = vpack.c.b16 %v666, %v665
      %v676 = vpack.c.b16 %v668, %v667
      %685 = vmatprep.subr.bf16.mxu0 0
      %686 = vmatpush1.bf16.msra.mxu0 %v669
      %687 = vmatprep.subr.bf16.mxu0 0
      %688 = vmatpush1.bf16.msra.mxu0 %v670
      %689 = vmatprep.subr.bf16.mxu0 0
      %690 = vmatpush1.bf16.msra.mxu0 %v671
      %691 = vmatprep.subr.bf16.mxu0 0
      %692 = vmatpush1.bf16.msra.mxu0 %v672
      %693 = vmatprep.subr.bf16.mxu0 0
      %694 = vmatpush1.bf16.msra.mxu0 %v673
      %695 = vmatprep.subr.bf16.mxu0 0
      %696 = vmatpush1.bf16.msra.mxu0 %v674
      %697 = vmatprep.subr.bf16.mxu0 0
      %698 = vmatpush1.bf16.msra.mxu0 %v675
      %699 = vmatprep.subr.bf16.mxu0 0
      %700 = vmatpush1.bf16.msra.mxu0 %v676
      %701 = vmatprep.subr.bf16.mxu0 0
      %702 = vmatpush1.bf16.msra.mxu0 0
      %703 = vmatprep.subr.bf16.mxu0 0
      %704 = vmatpush1.bf16.msra.mxu0 0
      %705 = vmatprep.subr.bf16.mxu0 0
      %706 = vmatpush1.bf16.msra.mxu0 0
      %707 = vmatprep.subr.bf16.mxu0 0
      %708 = vmatpush1.bf16.msra.mxu0 0
      %709 = vmatprep.subr.bf16.mxu0 0
      %710 = vmatpush1.bf16.msra.mxu0 0
      %711 = vmatprep.subr.bf16.mxu0 0
      %712 = vmatpush1.bf16.msra.mxu0 0
      %713 = vmatprep.subr.bf16.mxu0 0
      %714 = vmatpush1.bf16.msra.mxu0 0
      %715 = vmatprep.subr.bf16.mxu0 0
      %716 = vmatpush1.bf16.msra.mxu0 0
      %717 = vmatprep.mubr.bf16.mxu0 0
      %718 = vmatmul.mubr.bf16.gmra.mrb[0].mxu0 %v635
      %v719 = vpop.f32.mrb[0].mxu0
      %v720 = vadd.f32 %v629, %v719
      %v721 = vpop.f32.mrb[0].mxu0
      %v722 = vpop.f32.mrb[0].mxu0
      %v723 = vadd.f32 %v629, %v722
      %v724 = vpop.f32.mrb[0].mxu0
      %725 = vdwg.mxu0
      %v726 = vmax.f32 %v720, 0.0
      %v727 = vmax.f32 %v723, 0.0
      %v728 = vpack.c.bf16 %v727, %v726
      %v729 = vld [vmem:[%s287] sm:$0x1]
      %v731 = vlaneseq
      %v732 = vshrl.u32 %v731, 7
      %v733 = vsub.s32 0, %v732
      %v734 = vrot.slane %v729, %v733
      %736 = vmatprep.subr.bf16.mxu0 0
      %737 = vmatpush1.bf16.msra.mxu0 %v615
      %738 = vmatprep.subr.bf16.mxu0 0
      %739 = vmatpush1.bf16.msra.mxu0 %v616
      %740 = vmatprep.subr.bf16.mxu0 0
      %741 = vmatpush1.bf16.msra.mxu0 %v617
      %742 = vmatprep.subr.bf16.mxu0 0
      %743 = vmatpush1.bf16.msra.mxu0 %v618
      %744 = vmatprep.subr.bf16.mxu0 0
      %745 = vmatpush1.bf16.msra.mxu0 %v619
      %746 = vmatprep.subr.bf16.mxu0 0
      %747 = vmatpush1.bf16.msra.mxu0 %v620
      %748 = vmatprep.subr.bf16.mxu0 0
      %749 = vmatpush1.bf16.msra.mxu0 %v621
      %750 = vmatprep.subr.bf16.mxu0 0
      %751 = vmatpush1.bf16.msra.mxu0 %v622
      %752 = vmatprep.subr.bf16.mxu0 0
      %753 = vmatpush1.bf16.msra.mxu0 0
      %754 = vmatprep.subr.bf16.mxu0 0
      %755 = vmatpush1.bf16.msra.mxu0 0
      %756 = vmatprep.subr.bf16.mxu0 0
      %757 = vmatpush1.bf16.msra.mxu0 0
      %758 = vmatprep.subr.bf16.mxu0 0
      %759 = vmatpush1.bf16.msra.mxu0 0
      %760 = vmatprep.subr.bf16.mxu0 0
      %761 = vmatpush1.bf16.msra.mxu0 0
      %762 = vmatprep.subr.bf16.mxu0 0
      %763 = vmatpush1.bf16.msra.mxu0 0
      %764 = vmatprep.subr.bf16.mxu0 0
      %765 = vmatpush1.bf16.msra.mxu0 0
      %766 = vmatprep.subr.bf16.mxu0 0
      %767 = vmatpush1.bf16.msra.mxu0 0
      %768 = vmatprep.mubr.bf16.mxu0 0
      %769 = vmatmul.mubr.bf16.gmra.mrb[0].mxu0 %v728
      %v770 = vpop.f32.mrb[0].mxu0
      %v771 = vadd.f32 %v734, %v770
      %v772 = vpop.f32.mrb[0].mxu0
      %v773 = vpop.f32.mrb[0].mxu0
      %v774 = vadd.f32 %v734, %v773
      %v775 = vpop.f32.mrb[0].mxu0
      %776 = vdwg.mxu0
      %777 = vmax.xlane.f32.xlu0 %v771
      %v778 = vpop.xlane.xlu0 %777
      %779 = vmax.xlane.f32.xlu0 %v774
      %v780 = vpop.xlane.xlu0 %779
      %v781 = vsub.f32 %v771, %v778
      %v782 = vsub.f32 %v774, %v780
      %v783 = vmul.f32 %v781, 1.442695
      %v784 = vpow.pop %v783
      %v785 = vmul.f32 %v782, 1.442695
      %v786 = vpow.pop %v785
      %787 = vadd.xlane.f32.xlu0 %v784
      %v788 = vpop.xlane.xlu0 %787
      %789 = vadd.xlane.f32.xlu0 %v786
      %v790 = vpop.xlane.xlu0 %789
      %v791 = vrcp.pop %v788
      %v792 = vrcp.pop %v790
      %v793 = vmul.f32 %v784, %v791
      %v794 = vmul.f32 %v786, %v792
      %v795 = vpack.c.bf16 %v794, %v793
      %v796 = vld [vmem:[%s284] sm:$0xf]
      %v797 = vld [vmem:[%s284 + $0x4] sm:$0xf]
      %v798 = vld [vmem:[%s284 + $0x8] sm:$0xf]
      %v799 = vld [vmem:[%s284 + $0xc] sm:$0xf]
      %v800 = vld [vmem:[%s284 + $0x10] sm:$0xf]
      %v801 = vld [vmem:[%s284 + $0x14] sm:$0xf]
      %v802 = vld [vmem:[%s284 + $0x18] sm:$0xf]
      %v803 = vld [vmem:[%s284 + $0x1c] sm:$0xf]
      %v804 = vld [vmem:[%s284 + $0x20] sm:$0xf]
      %v805 = vld [vmem:[%s284 + $0x24] sm:$0xf]
      %v806 = vld [vmem:[%s284 + $0x28] sm:$0xf]
      %v807 = vld [vmem:[%s284 + $0x2c] sm:$0xf]
      %v808 = vld [vmem:[%s284 + $0x30] sm:$0xf]
      %v809 = vld [vmem:[%s284 + $0x34] sm:$0xf]
      %v810 = vld [vmem:[%s284 + $0x38] sm:$0xf]
      %v811 = vld [vmem:[%s284 + $0x3c] sm:$0xf]
      %v828 = vunpack.c.l.b16 %v796
      %v829 = vunpack.c.l.b16 %v797
      %v830 = vunpack.c.l.b16 %v798
      %v831 = vunpack.c.l.b16 %v799
      %v832 = vunpack.c.l.b16 %v800
      %v833 = vunpack.c.l.b16 %v801
      %v834 = vunpack.c.l.b16 %v802
      %v835 = vunpack.c.l.b16 %v803
      %v836 = vunpack.c.l.b16 %v804
      %v837 = vunpack.c.l.b16 %v805
      %v838 = vunpack.c.l.b16 %v806
      %v839 = vunpack.c.l.b16 %v807
      %v840 = vunpack.c.l.b16 %v808
      %v841 = vunpack.c.l.b16 %v809
      %v842 = vunpack.c.l.b16 %v810
      %v843 = vunpack.c.l.b16 %v811
      %v844 = vpack.c.b16 %v829, %v828
      %v845 = vpack.c.b16 %v831, %v830
      %v846 = vpack.c.b16 %v833, %v832
      %v847 = vpack.c.b16 %v835, %v834
      %v848 = vpack.c.b16 %v837, %v836
      %v849 = vpack.c.b16 %v839, %v838
      %v850 = vpack.c.b16 %v841, %v840
      %v851 = vpack.c.b16 %v843, %v842
      %860 = vmatprep.subr.bf16.mxu0 0
      %861 = vmatpush1.bf16.msra.mxu0 %v844
      %862 = vmatprep.subr.bf16.mxu0 0
      %863 = vmatpush1.bf16.msra.mxu0 %v845
      %864 = vmatprep.subr.bf16.mxu0 0
      %865 = vmatpush1.bf16.msra.mxu0 %v846
      %866 = vmatprep.subr.bf16.mxu0 0
      %867 = vmatpush1.bf16.msra.mxu0 %v847
      %868 = vmatprep.subr.bf16.mxu0 0
      %869 = vmatpush1.bf16.msra.mxu0 %v848
      %870 = vmatprep.subr.bf16.mxu0 0
      %871 = vmatpush1.bf16.msra.mxu0 %v849
      %872 = vmatprep.subr.bf16.mxu0 0
      %873 = vmatpush1.bf16.msra.mxu0 %v850
      %874 = vmatprep.subr.bf16.mxu0 0
      %875 = vmatpush1.bf16.msra.mxu0 %v851
      %876 = vmatprep.subr.bf16.mxu0 0
      %877 = vmatpush1.bf16.msra.mxu0 0
      %878 = vmatprep.subr.bf16.mxu0 0
      %879 = vmatpush1.bf16.msra.mxu0 0
      %880 = vmatprep.subr.bf16.mxu0 0
      %881 = vmatpush1.bf16.msra.mxu0 0
      %882 = vmatprep.subr.bf16.mxu0 0
      %883 = vmatpush1.bf16.msra.mxu0 0
      %884 = vmatprep.subr.bf16.mxu0 0
      %885 = vmatpush1.bf16.msra.mxu0 0
      %886 = vmatprep.subr.bf16.mxu0 0
      %887 = vmatpush1.bf16.msra.mxu0 0
      %888 = vmatprep.subr.bf16.mxu0 0
      %889 = vmatpush1.bf16.msra.mxu0 0
      %890 = vmatprep.subr.bf16.mxu0 0
      %891 = vmatpush1.bf16.msra.mxu0 0
      %892 = vmatprep.mubr.bf16.mxu0 0
      %893 = vmatmul.mubr.bf16.gmra.mrb[0].mxu0 %v795
      %v894 = vpop.f32.mrb[0].mxu0
      %v895 = vadd.f32 0.0, %v894
      %v896 = vpop.f32.mrb[0].mxu0
      %v897 = vpop.f32.mrb[0].mxu0
      %v898 = vadd.f32 0.0, %v897
      %v899 = vpop.f32.mrb[0].mxu0
      %900 = vdwg.mxu0
      %901 = vst [vmem:[%s296] sm:$0xff] %v895
      %902 = vst [vmem:[%s296 + $0x8] sm:$0xff] %v898
      %s903 = smul.u32 2, %s21
      %p904 = scmp.lt.s32.totalorder %s20, 1
      %s905 = scalar_select %p904, %s20, 1
      %p906 = scmp.lt.s32.totalorder %s903, 1
      %s907 = scalar_select %p906, %s903, 1
      %s908 = smul.addr %s905, 2
      %s909 = sadd.s32 %s907, %s908
      %s910 = smul.addr %s909, 8
      %s911 = scalar_lea.vmem %s5, %s910
      // Predicated region
      $region45: #{word_attention.1} parent=39 // pred_check
        %p912 = pneg %p170
      $region46: #{word_attention.1} parent=39 // pred_check_branch
        %914 = sbr.rel (%p912) target = $region48
      $region47: #{word_attention.1} parent=39 // pred_region
        %s915 = smul.u32 2, %s21
      $region48: #{word_attention.1} parent=39 // pred_fallthru
        _
    $region40: #{word_attention.1} parent=5 // pred_fallthru
      _
    %p916 = scmp.le.s32.totalorder 2, %s11
    // Predicated region
    $region49: #{word_attention.1} parent=5 // pred_check
      %p917 = pneg %p916
    $region50: #{word_attention.1} parent=5 // pred_check_branch
      %919 = sbr.rel (%p917) target = $region52
    $region51: #{word_attention.1} parent=5 // pred_region
      %s920 = ssub.s32 %s11, 2
      // Predicated region
      $region53: #{word_attention.1} parent=51 // pred_check
        %p921 = pneg %p176
      $region54: #{word_attention.1} parent=51 // pred_check_branch
        %923 = sbr.rel (%p921) target = $region56
      $region55: #{word_attention.1} parent=51 // pred_region
        %s924 = smul.u32 2, %s23
        %p925 = scmp.lt.s32.totalorder %s22, 1
        %s926 = scalar_select %p925, %s22, 1
        %p927 = scmp.lt.s32.totalorder %s924, 1
        %s928 = scalar_select %p927, %s924, 1
        %s929 = smul.addr %s926, 2
        %s930 = sadd.s32 %s928, %s929
        %s931 = smul.addr %s930, 8
        %s932 = scalar_lea.vmem %s5, %s931
      $region56: #{word_attention.1} parent=51 // pred_fallthru
        _
    $region52: #{word_attention.1} parent=5 // pred_fallthru
      _
  $region6: #{word_attention.1} parent=0 // loop_footer
    %s15 = sadd.s32 1, %s11
  $region7: #{word_attention.1} parent=0 // loop_footer_branch
    %10 = sbr.rel target = $region3
  $region8: #{word_attention.1} parent=0 // loop_exit
    _

</llo_original>
